<compile_context>
chip_gen: v6e
topology: v6e:2x2x1
jax: 0.10.0
libtpu: 0.0.40
codegen_flags: <defaults>
</compile_context>

<pallas_src>
import functools

import jax
import jax.numpy as jnp
from jax import lax
from jax.experimental import pallas as pl
from jax.experimental.pallas import tpu as pltpu

IGNORE_INDEX = -100
CONF_THRESH = 0.7


def _round_up(x, m):
    return (x + m - 1) // m * m


# ----------------------------------------------------------------------------
# Kernel 1: weighted cross-entropy partial sums.
#   out[i, 0, 0] = sum_{rows in block i} w[y] * nll     (numerator)
#   out[i, 0, 1] = sum_{rows in block i} w[y]           (denominator)
# ----------------------------------------------------------------------------
def _wce_partial_kernel(logits_ref, tgt_ref, w_ref, out_ref, *, block_rows, n_valid):
    i = pl.program_id(0)
    x = logits_ref[...].astype(jnp.float32)              # (TN, C)
    tgt = tgt_ref[...]                                    # (TN, 1) int32
    w = w_ref[...].astype(jnp.float32)                    # (1, C)

    # stable log-softmax pieces without materializing the full log_softmax
    m = jnp.max(x, axis=-1, keepdims=True)                # (TN, 1)
    shifted = x - m
    lse = jnp.log(jnp.sum(jnp.exp(shifted), axis=-1, keepdims=True))  # (TN, 1)

    lane = lax.broadcasted_iota(jnp.int32, x.shape, 1)    # (TN, C)
    onehot = lane == tgt                                  # all-False for ignore_index
    picked_shift = jnp.sum(jnp.where(onehot, shifted, 0.0), axis=-1, keepdims=True)
    picked_w = jnp.sum(jnp.where(onehot, w, 0.0), axis=-1, keepdims=True)
    nll = lse - picked_shift                              # = -log_softmax(x)[tgt]

    # rows beyond n_valid come from the ragged last block (garbage reads) -> drop
    row = i * block_rows + lax.broadcasted_iota(jnp.int32, (block_rows, 1), 0)
    rv = row < n_valid

    num = jnp.sum(jnp.where(rv, picked_w * nll, 0.0))
    den = jnp.sum(jnp.where(rv, picked_w, 0.0))

    out_lane = lax.broadcasted_iota(jnp.int32, out_ref.shape, 2)   # (1, 1, 128)
    out_ref[...] = jnp.where(out_lane == 0, num,
                             jnp.where(out_lane == 1, den, 0.0)).astype(jnp.float32)


def _weighted_ce(output, target, weight, *, block_rows=1024):
    n, c = output.shape
    tn = min(block_rows, _round_up(n, 8))
    nb = pl.cdiv(n, tn)

    tgt2d = target.astype(jnp.int32).reshape(n, 1)
    w2d = weight.astype(jnp.float32).reshape(1, c)

    kernel = functools.partial(_wce_partial_kernel, block_rows=tn, n_valid=n)
    part = pl.pallas_call(
        kernel,
        grid=(nb,),
        in_specs=[
            pl.BlockSpec((tn, c), lambda i: (i, 0)),
            pl.BlockSpec((tn, 1), lambda i: (i, 0)),
            pl.BlockSpec((1, c), lambda i: (0, 0)),
        ],
        out_specs=pl.BlockSpec((1, 1, 128), lambda i: (i, 0, 0)),
        out_shape=jax.ShapeDtypeStruct((nb, 1, 128), jnp.float32),
        compiler_params=pltpu.CompilerParams(
            dimension_semantics=("parallel",),
            vmem_limit_bytes=32 * 1024 * 1024,
        ),
        cost_estimate=pl.CostEstimate(
            flops=12 * n * c,
            transcendentals=2 * n * c,
            bytes_accessed=4 * n * c + 4 * n + 4 * c + nb * 128 * 4,
        ),
    )(output.astype(jnp.float32), tgt2d, w2d)

    s = jnp.sum(part[:, 0, :2], axis=0)                   # (2,) -> [num, den]
    return s[0] / s[1]


# ----------------------------------------------------------------------------
# Kernel 2: FixMatch-style pseudo-label loss partial sums.
#   out[i, 0, 0] = sum_{rows in block i} CE(output_u, argmax(output_u_w)) * mask
# ----------------------------------------------------------------------------
def _lu_partial_kernel(logits_w_ref, logits_u_ref, out_ref, *, block_rows, n_valid):
    i = pl.program_id(0)
    xw = logits_w_ref[...].astype(jnp.float32)            # (TN, C) weak-aug logits
    xu = logits_u_ref[...].astype(jnp.float32)            # (TN, C) strong-aug logits
    c = xw.shape[-1]

    # pseudo-label: max softmax prob and argmax (first max, matching torch.max)
    mw = jnp.max(xw, axis=-1, keepdims=True)
    sumexp_w = jnp.sum(jnp.exp(xw - mw), axis=-1, keepdims=True)
    max_prob = 1.0 / sumexp_w                             # == max(softmax(xw))
    lane = lax.broadcasted_iota(jnp.int32, xw.shape, 1)
    lane_f = lane.astype(jnp.float32)
    is_max = xw == mw
    argmax_f = jnp.min(jnp.where(is_max, lane_f, jnp.float32(c)),
                       axis=-1, keepdims=True)            # (TN, 1)
    onehot = lane_f == argmax_f

    conf = max_prob >= CONF_THRESH                        # (TN, 1) bool

    # unweighted CE(output_u, targets_u), reduction='none'
    mu = jnp.max(xu, axis=-1, keepdims=True)
    su = xu - mu
    lse_u = jnp.log(jnp.sum(jnp.exp(su), axis=-1, keepdims=True))
    picked = jnp.sum(jnp.where(onehot, su, 0.0), axis=-1, keepdims=True)
    nll_u = lse_u - picked                                # (TN, 1)

    row = i * block_rows + lax.broadcasted_iota(jnp.int32, (block_rows, 1), 0)
    rv = row < n_valid

    part = jnp.sum(jnp.where(jnp.logical_and(rv, conf), nll_u, 0.0))

    out_lane = lax.broadcasted_iota(jnp.int32, out_ref.shape, 2)   # (1, 1, 128)
    out_ref[...] = jnp.where(out_lane == 0, part, 0.0).astype(jnp.float32)


def _lu_loss(output_u_w, output_u, *, block_rows=1024):
    n, c = output_u_w.shape
    tn = min(block_rows, _round_up(n, 8))
    nb = pl.cdiv(n, tn)

    kernel = functools.partial(_lu_partial_kernel, block_rows=tn, n_valid=n)
    part = pl.pallas_call(
        kernel,
        grid=(nb,),
        in_specs=[
            pl.BlockSpec((tn, c), lambda i: (i, 0)),
            pl.BlockSpec((tn, c), lambda i: (i, 0)),
        ],
        out_specs=pl.BlockSpec((1, 1, 128), lambda i: (i, 0, 0)),
        out_shape=jax.ShapeDtypeStruct((nb, 1, 128), jnp.float32),
        compiler_params=pltpu.CompilerParams(
            dimension_semantics=("parallel",),
            vmem_limit_bytes=32 * 1024 * 1024,
        ),
        cost_estimate=pl.CostEstimate(
            flops=20 * n * c,
            transcendentals=3 * n * c,
            bytes_accessed=8 * n * c + nb * 128 * 4,
        ),
    )(output_u_w.astype(jnp.float32), output_u.astype(jnp.float32))

    # mean over ALL unlabeled rows (matches (ce*mask).mean())
    return jnp.sum(part[:, 0, 0]) / jnp.float32(n)


# ----------------------------------------------------------------------------
# Public wrapper == semi_loss.forward
# ----------------------------------------------------------------------------
def semi_loss(output, output_u_w, output_u, target, weight, *, block_rows=1024):
    ce_loss = _weighted_ce(output, target, weight, block_rows=block_rows)
    if output_u_w is not None:
        lu = _lu_loss(output_u_w, output_u, block_rows=block_rows)
    else:
        lu = jnp.float32(0.0)
    return ce_loss + lu


# ----------------------------------------------------------------------------
# Pure-JAX reference for verification.
# ----------------------------------------------------------------------------
def _reference(output, output_u_w, output_u, target, weight):
    logp = jax.nn.log_softmax(output.astype(jnp.float32), axis=-1)
    valid = target != IGNORE_INDEX
    t_safe = jnp.where(valid, target, 0)
    picked = jnp.take_along_axis(logp, t_safe[:, None], axis=-1)[:, 0]
    w_i = weight[t_safe] * valid.astype(jnp.float32)
    ce = jnp.sum(-picked * w_i) / jnp.sum(w_i)
    if output_u_w is not None:
        pseudo = jax.nn.softmax(output_u_w.astype(jnp.float32), axis=-1)
        max_probs = jnp.max(pseudo, axis=-1)
        targets_u = jnp.argmax(pseudo, axis=-1)
        mask = (max_probs >= CONF_THRESH).astype(jnp.float32)
        logp_u = jax.nn.log_softmax(output_u.astype(jnp.float32), axis=-1)
        nll_u = -jnp.take_along_axis(logp_u, targets_u[:, None], axis=-1)[:, 0]
        lu = jnp.mean(nll_u * mask)
    else:
        lu = 0.0
    return ce + lu


if __name__ == "__main__":
    key = jax.random.PRNGKey(0)
    k1, k2, k3, k4 = jax.random.split(key, 4)

    num_classes = 3  # matches the default weight list [1/561, 1/835, 1/522]
    weight = jnp.asarray([1.0 / 561, 1.0 / 835, 1.0 / 522], dtype=jnp.float32)

    n_lab, n_unlab = 20, 28  # not multiples of the row tile -> exercises ragged blocks
    output = 2.0 * jax.random.normal(k1, (n_lab, num_classes), dtype=jnp.float32)
    target = jax.random.randint(k2, (n_lab,), 0, num_classes, dtype=jnp.int32)
    target = target.at[3].set(IGNORE_INDEX)  # exercise ignore_index
    output_u_w = 3.0 * jax.random.normal(k3, (n_unlab, num_classes), dtype=jnp.float32)
    output_u = jax.random.normal(k4, (n_unlab, num_classes), dtype=jnp.float32)

    # small row tile so the test exercises a multi-block grid with a ragged last block
    loss = semi_loss(output, output_u_w, output_u, target, weight, block_rows=8)
    jax.block_until_ready(loss)
    ref = _reference(output, output_u_w, output_u, target, weight)
    assert jnp.allclose(loss, ref, atol=1e-5, rtol=1e-5), (loss, ref)

    # also the default (single-block) tile size
    loss_big = semi_loss(output, output_u_w, output_u, target, weight)
    jax.block_until_ready(loss_big)
    assert jnp.allclose(loss_big, ref, atol=1e-5, rtol=1e-5), (loss_big, ref)

    # also check the output_u_w is None branch (Lu == 0)
    loss0 = semi_loss(output, None, None, target, weight, block_rows=8)
    jax.block_until_ready(loss0)
    ref0 = _reference(output, None, None, target, weight)
    assert jnp.allclose(loss0, ref0, atol=1e-5, rtol=1e-5), (loss0, ref0)

    print("KERNEL_OK")
</pallas_src>

<mosaic_0001>
module attributes {stable_mosaic.version = 11 : i64} {
  func.func @_wce_partial_kernel(%arg0: i32, %arg1: memref<8x3xf32, #tpu.memory_space<vmem>>, %arg2: memref<8x1xi32, #tpu.memory_space<vmem>>, %arg3: memref<1x3xf32, #tpu.memory_space<vmem>>, %arg4: memref<1x1x128xf32, #tpu.memory_space<vmem>>) attributes {dimension_semantics = [#tpu.dimension_semantics<parallel>], iteration_bounds = array<i64: 3>, scalar_prefetch = 0 : i64, scratch_operands = 0 : i64, tpu.core_type = #tpu.core_type<tc>, window_params = [{transform_indices = @transform_0, window_bounds = array<i64: 8, 3>}, {transform_indices = @transform_1, window_bounds = array<i64: 8, 1>}, {pipeline_mode = #tpu.pipeline_mode<synchronous>, transform_indices = @transform_2, window_bounds = array<i64: 1, 3>}, {transform_indices = @transform_3, window_bounds = array<i64: 1, 1, 128>}]} {
    %c0 = arith.constant 0 : index
    %c0_0 = arith.constant 0 : index
    %0 = vector.load %arg1[%c0, %c0_0] : memref<8x3xf32, #tpu.memory_space<vmem>>, vector<8x3xf32>
    %c0_1 = arith.constant 0 : index
    %c0_2 = arith.constant 0 : index
    %1 = vector.load %arg2[%c0_1, %c0_2] : memref<8x1xi32, #tpu.memory_space<vmem>>, vector<8x1xi32>
    %c0_3 = arith.constant 0 : index
    %c0_4 = arith.constant 0 : index
    %2 = vector.load %arg3[%c0_3, %c0_4] : memref<1x3xf32, #tpu.memory_space<vmem>>, vector<1x3xf32>
    %cst = arith.constant dense<0xFF800000> : vector<8xf32>
    %3 = vector.multi_reduction <maximumf>, %0, %cst [1] : vector<8x3xf32> to vector<8xf32>
    %4 = vector.shape_cast %3 : vector<8xf32> to vector<8x1xf32>
    %5 = vector.broadcast %4 : vector<8x1xf32> to vector<8x3xf32>
    %6 = arith.subf %0, %5 : vector<8x3xf32>
    %7 = math.exp %6 : vector<8x3xf32>
    %cst_5 = arith.constant dense<0.000000e+00> : vector<8xf32>
    %8 = vector.multi_reduction <add>, %7, %cst_5 [1] : vector<8x3xf32> to vector<8xf32>
    %9 = vector.shape_cast %8 : vector<8xf32> to vector<8x1xf32>
    %10 = math.log %9 : vector<8x1xf32>
    %11 = tpu.iota {dimensions = array<i32: 1>} : vector<8x3xi32>
    %12 = vector.broadcast %1 : vector<8x1xi32> to vector<8x3xi32>
    %13 = arith.cmpi eq, %11, %12 : vector<8x3xi32>
    %cst_6 = arith.constant 0.000000e+00 : f32
    %14 = vector.broadcast %cst_6 : f32 to vector<8x3xf32>
    %15 = arith.select %13, %6, %14 : vector<8x3xi1>, vector<8x3xf32>
    %cst_7 = arith.constant dense<0.000000e+00> : vector<8xf32>
    %16 = vector.multi_reduction <add>, %15, %cst_7 [1] : vector<8x3xf32> to vector<8xf32>
    %17 = vector.shape_cast %16 : vector<8xf32> to vector<8x1xf32>
    %cst_8 = arith.constant 0.000000e+00 : f32
    %18 = vector.shape_cast %2 : vector<1x3xf32> to vector<1x3xf32>
    %19 = vector.broadcast %18 : vector<1x3xf32> to vector<8x3xf32>
    %20 = vector.broadcast %cst_8 : f32 to vector<8x3xf32>
    %21 = arith.select %13, %19, %20 : vector<8x3xi1>, vector<8x3xf32>
    %cst_9 = arith.constant dense<0.000000e+00> : vector<8xf32>
    %22 = vector.multi_reduction <add>, %21, %cst_9 [1] : vector<8x3xf32> to vector<8xf32>
    %23 = vector.shape_cast %22 : vector<8xf32> to vector<8x1xf32>
    %24 = arith.subf %10, %17 : vector<8x1xf32>
    %c8_i32 = arith.constant 8 : i32
    %25 = arith.muli %arg0, %c8_i32 : i32
    %26 = tpu.iota {dimensions = array<i32: 0>} : vector<8x1xi32>
    %27 = vector.broadcast %25 : i32 to vector<8x1xi32>
    %28 = arith.addi %27, %26 : vector<8x1xi32>
    %c20_i32 = arith.constant 20 : i32
    %29 = vector.broadcast %c20_i32 : i32 to vector<8x1xi32>
    %30 = arith.cmpi slt, %28, %29 : vector<8x1xi32>
    %31 = arith.mulf %23, %24 : vector<8x1xf32>
    %cst_10 = arith.constant 0.000000e+00 : f32
    %32 = vector.broadcast %cst_10 : f32 to vector<8x1xf32>
    %33 = arith.select %30, %31, %32 : vector<8x1xi1>, vector<8x1xf32>
    %34 = vector.shape_cast %33 : vector<8x1xf32> to vector<1x8x1xf32>
    %cst_11 = arith.constant dense<0.000000e+00> : vector<1xf32>
    %35 = vector.multi_reduction <add>, %34, %cst_11 [1, 2] : vector<1x8x1xf32> to vector<1xf32>
    %36 = vector.shape_cast %35 : vector<1xf32> to vector<1x1x1xf32>
    %37 = vector.extract %36[0, 0, 0] : f32 from vector<1x1x1xf32>
    %cst_12 = arith.constant 0.000000e+00 : f32
    %38 = vector.broadcast %cst_12 : f32 to vector<8x1xf32>
    %39 = arith.select %30, %23, %38 : vector<8x1xi1>, vector<8x1xf32>
    %40 = vector.shape_cast %39 : vector<8x1xf32> to vector<1x8x1xf32>
    %cst_13 = arith.constant dense<0.000000e+00> : vector<1xf32>
    %41 = vector.multi_reduction <add>, %40, %cst_13 [1, 2] : vector<1x8x1xf32> to vector<1xf32>
    %42 = vector.shape_cast %41 : vector<1xf32> to vector<1x1x1xf32>
    %43 = vector.extract %42[0, 0, 0] : f32 from vector<1x1x1xf32>
    %44 = tpu.iota {dimensions = array<i32: 2>} : vector<1x1x128xi32>
    %c0_i32 = arith.constant 0 : i32
    %45 = vector.broadcast %c0_i32 : i32 to vector<1x1x128xi32>
    %46 = arith.cmpi eq, %44, %45 : vector<1x1x128xi32>
    %c1_i32 = arith.constant 1 : i32
    %47 = vector.broadcast %c1_i32 : i32 to vector<1x1x128xi32>
    %48 = arith.cmpi eq, %44, %47 : vector<1x1x128xi32>
    %cst_14 = arith.constant 0.000000e+00 : f32
    %49 = vector.broadcast %43 : f32 to vector<1x1x128xf32>
    %50 = vector.broadcast %cst_14 : f32 to vector<1x1x128xf32>
    %51 = arith.select %48, %49, %50 : vector<1x1x128xi1>, vector<1x1x128xf32>
    %52 = vector.broadcast %37 : f32 to vector<1x1x128xf32>
    %53 = arith.select %46, %52, %51 : vector<1x1x128xi1>, vector<1x1x128xf32>
    %c0_15 = arith.constant 0 : index
    %c0_16 = arith.constant 0 : index
    %c0_17 = arith.constant 0 : index
    %54 = vector.load %arg4[%c0_15, %c0_16, %c0_17] : memref<1x1x128xf32, #tpu.memory_space<vmem>>, vector<1x1x128xf32>
    tpu.vector_store %arg4[%c0_15, %c0_16, %c0_17], %53 {strides = array<i32>} : memref<1x1x128xf32, #tpu.memory_space<vmem>>, vector<1x1x128xf32>,
    return
  }
  func.func @transform_0(%arg0: i32) -> (i32, i32) {
    %c0_i32 = arith.constant 0 : i32
    %c0_i32_0 = arith.constant 0 : i32
    return %arg0, %c0_i32 : i32, i32
  }
  func.func @transform_1(%arg0: i32) -> (i32, i32) {
    %c0_i32 = arith.constant 0 : i32
    %c0_i32_0 = arith.constant 0 : i32
    return %arg0, %c0_i32 : i32, i32
  }
  func.func @transform_2(%arg0: i32) -> (i32, i32) {
    %c0_i32 = arith.constant 0 : i32
    %c0_i32_0 = arith.constant 0 : i32
    %c0_i32_1 = arith.constant 0 : i32
    return %c0_i32, %c0_i32_0 : i32, i32
  }
  func.func @transform_3(%arg0: i32) -> (i32, i32, i32) {
    %c0_i32 = arith.constant 0 : i32
    %c0_i32_0 = arith.constant 0 : i32
    %c0_i32_1 = arith.constant 0 : i32
    return %arg0, %c0_i32, %c0_i32_0 : i32, i32, i32
  }
}

</mosaic_0001>

<llo_original>
// kernel: tpu_custom_call.1
$region0: #{tpu_custom_call.1}
  #allocation0 [shape = 'u32[]', space=smem, size = 0x4, offset = 0x4, fixed_abs, tag = 'smem constant byte address 0x4 - core index']
  #allocation1 [shape = 'u32[144,128]{1,0:T(1,128)}', space=vmem, size = 0x12000, scoped, tag = 'internal scratch']
  %s0 = inlined_call_operand.vmem [shape: f32[20,3], index: 0, kind: input, shape index: {}]
  %s1 = inlined_call_operand.vmem [shape: s32[20,1], index: 1, kind: input, shape index: {}]
  %s2 = inlined_call_operand.vmem [shape: f32[1,3], index: 2, kind: input, shape index: {}]
  %s3 = inlined_call_operand.hbm [shape: f32[3,1,128], index: 3, kind: output, shape index: {}]
  %s4 = sld [smem:[#allocation0]]
  $region45: #{tpu_custom_call.1} parent=0
    _
  %s6 = ssub.s32 1, %s4
  %s7 = scalar_select 0, %s6, %s4
  $region1: #{tpu_custom_call.1} parent=0
    #allocation2 [shape = 'u8[1024]{0}', space=vmem, size = 0x400, scoped, tag = 'output window, operand 0']
    #allocation3 [shape = 's32[2]{0}', space=sflag, size = 0x8, scoped, tag = 'scoped memory for tpu_custom_call.1']
    %8 = vsyncpa [#allocation3], 0
    %s9 = scalar_lea.sflag [#allocation3], 1
    %10 = vsyncpa %s9, 0
    loop: start=0, step=1, limit=5
    $region2: #{tpu_custom_call.1} parent=1 // loop_pre_header
      _
    $region3: #{tpu_custom_call.1} parent=1 // loop_header
      %s12 = sphi 0, %s16
      %p13 = scmp.ge.s32.totalorder %s12, 5
      %s22 = sphi 0, %s24
      %s25 = sphi 0, %s22
      %s26 = sphi 0, %s25
      %s42 = sphi 0, %s26
      %s48 = sphi 0, %s50
      %s51 = sphi 0, %s48
      %s52 = sphi 0, %s51
      %s68 = sphi 0, %s52
      %s72 = sphi 0, %s72
      %s74 = sphi 0, %s72
      %s75 = sphi 0, %s74
      %s89 = sphi 0, %s75
      %s95 = sphi 0, %s97
      %s98 = sphi 0, %s95
      %s99 = sphi 0, %s98
      %s115 = sphi 0, %s99
    $region4: #{tpu_custom_call.1} parent=1 // loop_header_branch
      %15 = sbr.rel (%p13) target = $region8
    $region5: #{tpu_custom_call.1} parent=1 // loop_body
      %s17 = ssub.s32 %s12, 1
      %s18 = ssub.s32 %s12, 2
      %s19 = sadd.s32 %s12, 1
      %s20 = ssub.s32 %s12, %s19
      %p21 = scmp.eq.s32.totalorder %s20, 0
      %s23 = sadd.s32 %s22, 1
      %s24 = scalar_select %p21, %s22, %s23
      %p27 = pneg %p21
      %p28 = scmp.eq.s32.totalorder %s12, 2
      %p29 = por %p27, %p28
      %p30 = scmp.ne.s32.totalorder %s22, %s25
      %p31 = scmp.eq.s32.totalorder %s12, 0
      %p32 = por %p30, %p31
      %p33 = scmp.ne.s32.totalorder %s22, %s25
      %p34 = scmp.eq.s32.totalorder %s17, 2
      %p35 = por %p33, %p34
      %p36 = scmp.ne.s32.totalorder %s25, %s26
      %p37 = scmp.eq.s32.totalorder %s17, 0
      %p38 = por %p36, %p37
      %p39 = scmp.ne.s32.totalorder %s25, %s26
      %p40 = scmp.eq.s32.totalorder %s18, 2
      %p41 = por %p39, %p40
      %p43 = scmp.ne.s32.totalorder %s26, %s42
      %p44 = scmp.eq.s32.totalorder %s18, 0
      %p45 = por %p43, %p44
      %s46 = ssub.s32 %s12, %s19
      %p47 = scmp.eq.s32.totalorder %s46, 0
      %s49 = sadd.s32 %s48, 1
      %s50 = scalar_select %p47, %s48, %s49
      %p53 = pneg %p47
      %p54 = scmp.eq.s32.totalorder %s12, 2
      %p55 = por %p53, %p54
      %p56 = scmp.ne.s32.totalorder %s48, %s51
      %p57 = scmp.eq.s32.totalorder %s12, 0
      %p58 = por %p56, %p57
      %p59 = scmp.ne.s32.totalorder %s48, %s51
      %p60 = scmp.eq.s32.totalorder %s17, 2
      %p61 = por %p59, %p60
      %p62 = scmp.ne.s32.totalorder %s51, %s52
      %p63 = scmp.eq.s32.totalorder %s17, 0
      %p64 = por %p62, %p63
      %p65 = scmp.ne.s32.totalorder %s51, %s52
      %p66 = scmp.eq.s32.totalorder %s18, 2
      %p67 = por %p65, %p66
      %p69 = scmp.ne.s32.totalorder %s52, %s68
      %p70 = scmp.eq.s32.totalorder %s18, 0
      %p71 = por %p69, %p70
      %s73 = sadd.s32 %s72, 1
      %p76 = scmp.eq.s32.totalorder %s12, 2
      %p77 = scmp.ne.s32.totalorder %s72, %s74
      %p78 = scmp.eq.s32.totalorder %s12, 0
      %p79 = por %p77, %p78
      %p80 = scmp.ne.s32.totalorder %s72, %s74
      %p81 = scmp.eq.s32.totalorder %s17, 2
      %p82 = por %p80, %p81
      %p83 = scmp.ne.s32.totalorder %s74, %s75
      %p84 = scmp.eq.s32.totalorder %s17, 0
      %p85 = por %p83, %p84
      %p86 = scmp.ne.s32.totalorder %s74, %s75
      %p87 = scmp.eq.s32.totalorder %s18, 2
      %p88 = por %p86, %p87
      %p90 = scmp.ne.s32.totalorder %s75, %s89
      %p91 = scmp.eq.s32.totalorder %s18, 0
      %p92 = por %p90, %p91
      %s93 = ssub.s32 %s12, %s19
      %p94 = scmp.eq.s32.totalorder %s93, 0
      %s96 = sadd.s32 %s95, 1
      %s97 = scalar_select %p94, %s95, %s96
      %p100 = pneg %p94
      %p101 = scmp.eq.s32.totalorder %s12, 2
      %p102 = por %p100, %p101
      %p103 = scmp.ne.s32.totalorder %s95, %s98
      %p104 = scmp.eq.s32.totalorder %s12, 0
      %p105 = por %p103, %p104
      %p106 = scmp.ne.s32.totalorder %s95, %s98
      %p107 = scmp.eq.s32.totalorder %s17, 2
      %p108 = por %p106, %p107
      %p109 = scmp.ne.s32.totalorder %s98, %s99
      %p110 = scmp.eq.s32.totalorder %s17, 0
      %p111 = por %p109, %p110
      %p112 = scmp.ne.s32.totalorder %s98, %s99
      %p113 = scmp.eq.s32.totalorder %s18, 2
      %p114 = por %p112, %p113
      %p116 = scmp.ne.s32.totalorder %s99, %s115
      %p117 = scmp.eq.s32.totalorder %s18, 0
      %p118 = por %p116, %p117
      %p119 = scmp.le.s32.totalorder 1, %s12
      %p120 = scmp.lt.s32.totalorder %s12, 4
      %p121 = pnand %p119, %p120
      %p122 = pneg %p121
      // Predicated region
      $region9: #{tpu_custom_call.1} parent=5 // pred_check
        _
      $region10: #{tpu_custom_call.1} parent=5 // pred_check_branch
        %124 = sbr.rel (%p121) target = $region12
      $region11: #{tpu_custom_call.1} parent=5 // pred_region
        %s125 = ssub.s32 %s12, 1
        // Predicated region
        $region13: #{tpu_custom_call.1} parent=11 // pred_check
          %p126 = pneg %p85
        $region14: #{tpu_custom_call.1} parent=11 // pred_check_branch
          %128 = sbr.rel (%p126) target = $region16
        $region15: #{tpu_custom_call.1} parent=11 // pred_region
          _
        $region16: #{tpu_custom_call.1} parent=11 // pred_fallthru
          _
      $region12: #{tpu_custom_call.1} parent=5 // pred_fallthru
        _
      %p129 = scmp.lt.s32.totalorder %s12, 3
      // Predicated region
      $region17: #{tpu_custom_call.1} parent=5 // pred_check
        %p130 = pneg %p129
      $region18: #{tpu_custom_call.1} parent=5 // pred_check_branch
        %132 = sbr.rel (%p130) target = $region20
      $region19: #{tpu_custom_call.1} parent=5 // pred_region
        // Predicated region
        $region21: #{tpu_custom_call.1} parent=19 // pred_check
          %p133 = pneg %p32
        $region22: #{tpu_custom_call.1} parent=19 // pred_check_branch
          %135 = sbr.rel (%p133) target = $region24
        $region23: #{tpu_custom_call.1} parent=19 // pred_region
          %p136 = scmp.lt.s32.totalorder %s12, 2
          %s137 = scalar_select %p136, %s12, 2
          %s138 = smul.addr %s137, 8
          %s139 = scalar_lea.vmem %s0, %s138
        $region24: #{tpu_custom_call.1} parent=19 // pred_fallthru
          _
        // Predicated region
        $region25: #{tpu_custom_call.1} parent=19 // pred_check
          %p140 = pneg %p58
        $region26: #{tpu_custom_call.1} parent=19 // pred_check_branch
          %142 = sbr.rel (%p140) target = $region28
        $region27: #{tpu_custom_call.1} parent=19 // pred_region
          %p143 = scmp.lt.s32.totalorder %s12, 2
          %s144 = scalar_select %p143, %s12, 2
          %s145 = smul.addr %s144, 8
          %s146 = scalar_lea.vmem %s1, %s145
        $region28: #{tpu_custom_call.1} parent=19 // pred_fallthru
          _
      $region20: #{tpu_custom_call.1} parent=5 // pred_fallthru
        _
      %p147 = scmp.le.s32.totalorder 1, %s12
      %p148 = scmp.lt.s32.totalorder %s12, 4
      %p149 = pnand %p147, %p148
      %p150 = pneg %p149
      // Predicated region
      $region29: #{tpu_custom_call.1} parent=5 // pred_check
        _
      $region30: #{tpu_custom_call.1} parent=5 // pred_check_branch
        %152 = sbr.rel (%p149) target = $region32
      $region31: #{tpu_custom_call.1} parent=5 // pred_region
        %s153 = ssub.s32 %s12, 1
        %p154 = scmp.lt.s32.totalorder %s17, 2
        %s155 = scalar_select %p154, %s17, 2
        %s156 = smul.addr %s155, 8
        %s157 = scalar_lea.vmem %s0, %s156
        %p158 = pneg %p38
        %p159 = pneg %p35
        %p160 = scmp.lt.s32.totalorder %s17, 2
        %s161 = scalar_select %p160, %s17, 2
        %s162 = smul.addr %s161, 8
        %s163 = scalar_lea.vmem %s1, %s162
        %p164 = pneg %p64
        %p165 = pneg %p61
        %p166 = pneg %p85
        %p167 = pneg %p82
        %p168 = pneg %p111
        %p169 = pneg %p108
        %s170 = sand.u32 %s98, 1
        %s171 = scalar_lea.sflag [#allocation3], %s170
        %s172 = sand.u32 %s98, 1
        %s173 = scalar_lea.vmem [#allocation2], %s172
        %p174 = scmp.lt.s32.totalorder %s17, 2
        %s175 = scalar_select %p174, %s17, 2
        %s176 = smul.addr %s175, 8
        %s177 = scalar_lea.vmem %s0, %s176
        %p178 = scmp.lt.s32.totalorder %s17, 2
        %s179 = scalar_select %p178, %s17, 2
        %s180 = smul.addr %s179, 8
        %s181 = scalar_lea.vmem %s1, %s180
        %v182 = vld [vmem:[%s177] sm:$0xff]
        %v183 = vld [vmem:[%s181] sm:$0xff]
        %v184 = vld [vmem:[%s2] sm:$0x1]
        %vm185 = vcmask 23552
        %v186 = vsel %vm185, %v182, -inf
        %187 = vmax.xlane.f32.xlu0 %v186
        %v188 = vpop.xlane.xlu0 %187
        %v189 = vsub.f32 %v182, %v188
        %v190 = vmul.f32 %v189, 1.442695
        %v191 = vpow.pop %v190
        %v192 = vsel %vm185, %v191, 0.0
        %193 = vadd.xlane.f32.xlu0 %v192
        %v194 = vpop.xlane.xlu0 %193
        %v195 = vlog2.pop %v194
        %v196 = vmul.f32 %v195, 0.6931472
        %v197 = vlaneseq
        %v198 = vand.u32 %v197, 127
        %199 = vset.pattern.permute.xlu0 0
        %200 = vperm.xlu0 %199, %v183
        %v201 = vpop.permute.xlu0 %200
        %vm202 = vcmp.eq.s32.totalorder %v198, %v201
        %v203 = vsel %vm202, %v189, 0.0
        %v204 = vsel %vm185, %v203, 0.0
        %205 = vadd.xlane.f32.xlu0 %v204
        %v206 = vpop.xlane.xlu0 %205
        %v208 = vlaneseq
        %v209 = vshrl.u32 %v208, 7
        %v210 = vsub.s32 0, %v209
        %v211 = vrot.slane %v184, %v210
        %v213 = vsel %vm202, %v211, 0.0
        %v214 = vsel %vm185, %v213, 0.0
        %215 = vadd.xlane.f32.xlu0 %v214
        %v216 = vpop.xlane.xlu0 %215
        %v217 = vsub.f32 %v196, %v206
        %s218 = smul.u32 %s17, 8
        %v219 = vlaneseq
        %v220 = vshrl.u32 %v219, 7
        %v221 = vstv %s218
        %v222 = vadd.s32 %v221, %v220
        %vm223 = vcmp.lt.s32.totalorder %v222, 20
        %v224 = vmul.f32 %v216, %v217
        %v225 = vsel %vm223, %v224, 0.0
        %vm226 = vcmask 7168
        %v227 = vsel %vm226, %v225, 0.0
        %228 = vadd.xlane.f32.xlu0 %v227
        %v229 = vpop.xlane.xlu0 %228
        %v230 = vrot.slane %v229, 4
        %v231 = vadd.f32 %v229, %v230
        %v232 = vrot.slane %v231, 2
        %v233 = vadd.f32 %v231, %v232
        %v234 = vrot.slane %v233, 1
        %v235 = vadd.f32 %v233, %v234
        %s236 = vtos %v235
        %v237 = vsel %vm223, %v216, 0.0
        %v238 = vsel %vm226, %v237, 0.0
        %239 = vadd.xlane.f32.xlu0 %v238
        %v240 = vpop.xlane.xlu0 %239
        %v241 = vrot.slane %v240, 4
        %v242 = vadd.f32 %v240, %v241
        %v243 = vrot.slane %v242, 2
        %v244 = vadd.f32 %v242, %v243
        %v245 = vrot.slane %v244, 1
        %v246 = vadd.f32 %v244, %v245
        %s247 = vtos %v246
        %vm248 = vcmp.eq.s32.totalorder %v198, 0
        %vm249 = vcmp.eq.s32.totalorder %v198, 1
        %v250 = vstv %s247
        %v251 = vsel %vm249, %v250, 0.0
        %v252 = vstv %s236
        %v253 = vsel %vm248, %v252, %v251
        %254 = vst [vmem:[%s173] sm:$0x1] %v253
        %s255 = sand.u32 %s98, 1
        %s256 = scalar_lea.sflag [#allocation3], %s255
        %s257 = sand.u32 %s98, 1
        %s258 = scalar_lea.vmem [#allocation2], %s257
        // Predicated region
        $region33: #{tpu_custom_call.1} parent=31 // pred_check
          %p259 = pneg %p108
        $region34: #{tpu_custom_call.1} parent=31 // pred_check_branch
          %261 = sbr.rel (%p259) target = $region36
        $region35: #{tpu_custom_call.1} parent=31 // pred_region
          %s263 = ssub.s32 16, 16
          %264 = vsyncadd %s256, %s263
          %s265 = smul.addr %s17, 16
          %s266 = scalar_lea.hbm %s3, %s265
          %s268 = sshll.u32 %s258, 4
          %s269 = int_to_ptr.vmem [resolvable:$true] %s268
          %271 = dma.vmem_to_hbm [thread:$0]  %s269, 16, %s266, %s256
        $region36: #{tpu_custom_call.1} parent=31 // pred_fallthru
          _
      $region32: #{tpu_custom_call.1} parent=5 // pred_fallthru
        _
      %p272 = scmp.le.s32.totalorder 2, %s12
      // Predicated region
      $region37: #{tpu_custom_call.1} parent=5 // pred_check
        %p273 = pneg %p272
      $region38: #{tpu_custom_call.1} parent=5 // pred_check_branch
        %275 = sbr.rel (%p273) target = $region40
      $region39: #{tpu_custom_call.1} parent=5 // pred_region
        %s276 = ssub.s32 %s12, 2
        // Predicated region
        $region41: #{tpu_custom_call.1} parent=39 // pred_check
          %p277 = pneg %p114
        $region42: #{tpu_custom_call.1} parent=39 // pred_check_branch
          %279 = sbr.rel (%p277) target = $region44
        $region43: #{tpu_custom_call.1} parent=39 // pred_region
          %s280 = sand.u32 %s99, 1
          %s281 = scalar_lea.sflag [#allocation3], %s280
          %s282 = sand.u32 %s99, 1
          %s283 = scalar_lea.vmem [#allocation2], %s282
          %284 = dma.done %s281, 16
        $region44: #{tpu_custom_call.1} parent=39 // pred_fallthru
          _
      $region40: #{tpu_custom_call.1} parent=5 // pred_fallthru
        _
    $region6: #{tpu_custom_call.1} parent=1 // loop_footer
      %s16 = sadd.s32 1, %s12
    $region7: #{tpu_custom_call.1} parent=1 // loop_footer_branch
      %11 = sbr.rel target = $region3
    $region8: #{tpu_custom_call.1} parent=1 // loop_exit
      _
    %285 = vsyncpa [#allocation3], 1
    %s286 = scalar_lea.sflag [#allocation3], 1
    %287 = vsyncpa %s286, 1

</llo_original>
